<compile_context>
chip_gen: v7x
topology: tpu7x:2x2x1
jax: 0.10.0
libtpu: 0.0.40
codegen_flags: <defaults>
</compile_context>

<pallas_src>
import jax
import jax.numpy as jnp
from jax.experimental import pallas as pl
from jax.experimental.pallas import tpu as pltpu


# TODO(synk): `_get_encoder()` is abstract in the PyTorch base class; a
# deterministic flatten+linear feature extractor is synthesized here.


def _round_up(x: int, m: int) -> int:
    return ((x + m - 1) // m) * m


def _linear_encoder_kernel(x_ref, w_ref, b_ref, o_ref):
    """Grid = (batch tiles, feature tiles, K tiles). Accumulates into o_ref."""
    k = pl.program_id(2)

    # Output block index is constant across k, so o_ref stays VMEM-resident:
    # seed it with the (broadcast) bias on the first K step, accumulate after.
    @pl.when(k == 0)
    def _():
        o_ref[...] = jnp.broadcast_to(b_ref[...], o_ref.shape)

    o_ref[...] += jnp.dot(
        x_ref[...], w_ref[...], preferred_element_type=jnp.float32
    )


def tile_encoder_forward(
    images,
    weight,
    bias,
    *,
    compute_dtype=jnp.float32,   # set jnp.bfloat16 on v6e/v7x for big shapes
    max_tk=2048,                 # K tile cap (whole K if it fits)
    max_tb=256,                  # batch tile cap (MXU rows)
    max_te=512,                  # feature tile cap (lane-dense multiples of 128)
):
    """TileEncoder.forward: identity preprocessing + linear feature extractor.

    images: [B, C, H, W] float32 (NCHW)
    weight: [C*H*W, num_encoding] float32
    bias:   [num_encoding] float32
    returns [B, num_encoding] float32
    """
    B, C, H, W = images.shape
    K = C * H * W
    E = weight.shape[1]
    assert weight.shape[0] == K

    # --- pad to TPU-friendly granularities (sublane 8, lane 128) ---
    Bp = _round_up(B, 8)
    tb = Bp if Bp <= max_tb else max_tb
    Bp = _round_up(Bp, tb)

    Ep = _round_up(E, 128)
    te = Ep if Ep <= max_te else max_te
    Ep = _round_up(Ep, te)

    Kp = _round_up(K, 128)
    tk = Kp if Kp <= max_tk else max_tk
    Kp = _round_up(Kp, tk)

    # Identity preprocessing (Compose([])) + flatten + zero padding (plain JAX).
    x = images.reshape(B, K)
    x = jnp.pad(x, ((0, Bp - B), (0, Kp - K))).astype(compute_dtype)
    w = jnp.pad(weight, ((0, Kp - K), (0, Ep - E))).astype(compute_dtype)
    b2d = jnp.pad(bias, (0, Ep - E)).reshape(1, Ep).astype(jnp.float32)

    grid = (Bp // tb, Ep // te, Kp // tk)

    itemsize = jnp.dtype(compute_dtype).itemsize
    cost = pl.CostEstimate(
        flops=2 * Bp * Kp * Ep,
        transcendentals=0,
        bytes_accessed=(Bp * Kp * itemsize      # x stream
                        + Kp * Ep * itemsize    # W stream
                        + Ep * 4                # bias
                        + Bp * Ep * 4),         # output
    )

    out = pl.pallas_call(
        _linear_encoder_kernel,
        out_shape=jax.ShapeDtypeStruct((Bp, Ep), jnp.float32),
        grid_spec=pltpu.PrefetchScalarGridSpec(
            num_scalar_prefetch=0,
            grid=grid,
            in_specs=[
                pl.BlockSpec((tb, tk), lambda i, j, k: (i, k)),  # X tile
                pl.BlockSpec((tk, te), lambda i, j, k: (k, j)),  # W tile
                pl.BlockSpec((1, te), lambda i, j, k: (0, j)),   # bias (resident)
            ],
            out_specs=pl.BlockSpec((tb, te), lambda i, j, k: (i, j)),
        ),
        compiler_params=pltpu.CompilerParams(
            dimension_semantics=("parallel", "parallel", "arbitrary"),
        ),
        cost_estimate=cost,
    )(x, w, b2d)

    # Slice padded result back to the true (B, num_encoding).
    return out[:B, :E]


if __name__ == "__main__":
    # Small shapes consistent with TileEncoder(tile_size=16, n_channels=4):
    # input_dim = (4, 16, 16), batch of 2 tiles, num_encoding = 32.
    B, C, H, W = 2, 4, 16, 16
    E = 32
    K = C * H * W

    key = jax.random.PRNGKey(0)
    k_img, k_w, k_b = jax.random.split(key, 3)

    images = jax.random.normal(k_img, (B, C, H, W), dtype=jnp.float32)
    # Deterministic in-script parameter init (synthetic, no checkpoint load).
    weight = jax.random.normal(k_w, (K, E), dtype=jnp.float32) * (1.0 / K ** 0.5)
    bias = jax.random.normal(k_b, (E,), dtype=jnp.float32) * 0.01

    feats = tile_encoder_forward(images, weight, bias)
    feats = jax.block_until_ready(feats)

    # Pure-JAX reference of the same forward semantics.
    ref = images.reshape(B, K) @ weight + bias
    assert feats.shape == (B, E)
    assert jnp.allclose(feats, ref, atol=1e-4, rtol=1e-4)

    print("KERNEL_OK")
</pallas_src>

<mosaic_0001>
module attributes {stable_mosaic.version = 11 : i64} {
  func.func @_linear_encoder_kernel(%arg0: i32, %arg1: i32, %arg2: i32, %arg3: memref<8x1024xf32, #tpu.memory_space<vmem>>, %arg4: memref<1024x128xf32, #tpu.memory_space<vmem>>, %arg5: memref<1x128xf32, #tpu.memory_space<vmem>>, %arg6: memref<8x128xf32, #tpu.memory_space<vmem>>) attributes {dimension_semantics = [#tpu.dimension_semantics<parallel>, #tpu.dimension_semantics<parallel>, #tpu.dimension_semantics<arbitrary>], iteration_bounds = array<i64: 1, 1, 1>, scalar_prefetch = 0 : i64, scratch_operands = 0 : i64, tpu.core_type = #tpu.core_type<tc>, window_params = [{transform_indices = @transform_0, window_bounds = array<i64: 8, 1024>}, {transform_indices = @transform_1, window_bounds = array<i64: 1024, 128>}, {transform_indices = @transform_2, window_bounds = array<i64: 1, 128>}, {transform_indices = @transform_3, window_bounds = array<i64: 8, 128>}]} {
    %c0_i32 = arith.constant 0 : i32
    %0 = arith.cmpi eq, %arg2, %c0_i32 : i32
    %1 = arith.extui %0 : i1 to i32
    %c0_i32_0 = arith.constant 0 : i32
    %2 = arith.cmpi ne, %1, %c0_i32_0 : i32
    scf.if %2 {
      %c0_8 = arith.constant 0 : index
      %c0_9 = arith.constant 0 : index
      %9 = vector.load %arg5[%c0_8, %c0_9] : memref<1x128xf32, #tpu.memory_space<vmem>>, vector<1x128xf32>
      %10 = vector.shape_cast %9 : vector<1x128xf32> to vector<1x128xf32>
      %11 = vector.broadcast %10 : vector<1x128xf32> to vector<8x128xf32>
      %c0_10 = arith.constant 0 : index
      %c0_11 = arith.constant 0 : index
      %12 = vector.load %arg6[%c0_10, %c0_11] : memref<8x128xf32, #tpu.memory_space<vmem>>, vector<8x128xf32>
      tpu.vector_store %arg6[%c0_10, %c0_11], %11 {strides = array<i32>} : memref<8x128xf32, #tpu.memory_space<vmem>>, vector<8x128xf32>,
    } else {
    }
    %c0 = arith.constant 0 : index
    %c0_1 = arith.constant 0 : index
    %3 = vector.load %arg6[%c0, %c0_1] : memref<8x128xf32, #tpu.memory_space<vmem>>, vector<8x128xf32>
    %c0_2 = arith.constant 0 : index
    %c0_3 = arith.constant 0 : index
    %4 = vector.load %arg3[%c0_2, %c0_3] : memref<8x1024xf32, #tpu.memory_space<vmem>>, vector<8x1024xf32>
    %c0_4 = arith.constant 0 : index
    %c0_5 = arith.constant 0 : index
    %5 = vector.load %arg4[%c0_4, %c0_5] : memref<1024x128xf32, #tpu.memory_space<vmem>>, vector<1024x128xf32>
    %cst = arith.constant dense<0.000000e+00> : vector<8x128xf32>
    %6 = tpu.matmul %4, %5, %cst {dimension_numbers = #tpu.dot_dimension_numbers<[1], [0], [0], [1], [0, 0, 1, 1], [], []>} : vector<8x1024xf32>, vector<1024x128xf32>, vector<8x128xf32> -> vector<8x128xf32>
    %7 = arith.addf %3, %6 : vector<8x128xf32>
    %c0_6 = arith.constant 0 : index
    %c0_7 = arith.constant 0 : index
    %8 = vector.load %arg6[%c0_6, %c0_7] : memref<8x128xf32, #tpu.memory_space<vmem>>, vector<8x128xf32>
    tpu.vector_store %arg6[%c0_6, %c0_7], %7 {strides = array<i32>} : memref<8x128xf32, #tpu.memory_space<vmem>>, vector<8x128xf32>,
    return
  }
  func.func @transform_0(%arg0: i32, %arg1: i32, %arg2: i32) -> (i32, i32) {
    %c0_i32 = arith.constant 0 : i32
    return %arg0, %arg2 : i32, i32
  }
  func.func @transform_1(%arg0: i32, %arg1: i32, %arg2: i32) -> (i32, i32) {
    %c0_i32 = arith.constant 0 : i32
    return %arg2, %arg1 : i32, i32
  }
  func.func @transform_2(%arg0: i32, %arg1: i32, %arg2: i32) -> (i32, i32) {
    %c0_i32 = arith.constant 0 : i32
    %c0_i32_0 = arith.constant 0 : i32
    return %c0_i32, %arg1 : i32, i32
  }
  func.func @transform_3(%arg0: i32, %arg1: i32, %arg2: i32) -> (i32, i32) {
    %c0_i32 = arith.constant 0 : i32
    return %arg0, %arg1 : i32, i32
  }
}

</mosaic_0001>

<llo_original>
// kernel: tpu_custom_call.1
$region0: #{tpu_custom_call.1}
  #allocation0 [shape = 'u32[]', space=smem, size = 0x4, offset = 0x4, fixed_abs, tag = 'smem constant byte address 0x4 - core index']
  #allocation1 [shape = 'u32[144,128]{1,0:T(1,128)}', space=vmem, size = 0x12000, scoped, tag = 'internal scratch']
  %s0 = inlined_call_operand.hbm [shape: f32[8,1024], index: 0, kind: input, shape index: {}]
  %s1 = inlined_call_operand.hbm [shape: f32[1024,128], index: 1, kind: input, shape index: {}]
  %s2 = inlined_call_operand.vmem [shape: f32[1,128], index: 2, kind: input, shape index: {}]
  %s3 = inlined_call_operand.hbm [shape: f32[8,128], index: 3, kind: output, shape index: {}]
  %s4 = sld [smem:[#allocation0]]
  $region34: #{tpu_custom_call.1} parent=0
    _
  %s6 = ssub.s32 1, %s4
  %s7 = scalar_select 0, %s6, %s4
  $region1: #{tpu_custom_call.1} parent=0
    #allocation2 [shape = 'u8[32768]{0}', space=vmem, size = 0x8000, scoped, tag = 'input window, operand 0, single buffered']
    #allocation3 [shape = 's32[1]{0}', space=sflag, size = 0x4, scoped, tag = 'scoped memory for tpu_custom_call.1']
    #allocation4 [shape = 's32[1]{0}', space=sflag, size = 0x4, scoped, tag = 'scoped memory for tpu_custom_call.1']
    #allocation5 [shape = 'u8[524288]{0}', space=vmem, size = 0x80000, scoped, tag = 'input window, operand 1, single buffered']
    #allocation6 [shape = 's32[1]{0}', space=sflag, size = 0x4, scoped, tag = 'scoped memory for tpu_custom_call.1']
    #allocation7 [shape = 'u8[4096]{0}', space=vmem, size = 0x1000, scoped, tag = 'output window, operand 0, single buffered']
    %8 = vsyncpa [#allocation3], 0
    %9 = vsyncpa [#allocation6], 0
    %10 = vsyncpa [#allocation4], 0
    // Predicated region
    $region2: #{tpu_custom_call.1} parent=1 // pred_check
      _
    $region3: #{tpu_custom_call.1} parent=1 // pred_check_branch
      %12 = sbr.rel (0) target = $region5
    $region4: #{tpu_custom_call.1} parent=1 // pred_region
      %s14 = ssub.s32 1024, 1024
      %15 = vsyncadd [#allocation3], %s14
      %s17 = sshll.u32 [#allocation2], 4
      %s18 = int_to_ptr.vmem [resolvable:$true] %s17
      %20 = dma.hbm_to_vmem [thread:$0]  %s0, 1024, %s18, [#allocation3]
    $region5: #{tpu_custom_call.1} parent=1 // pred_fallthru
      _
    // Predicated region
    $region6: #{tpu_custom_call.1} parent=1 // pred_check
      _
    $region7: #{tpu_custom_call.1} parent=1 // pred_check_branch
      %22 = sbr.rel (0) target = $region9
    $region8: #{tpu_custom_call.1} parent=1 // pred_region
      %s24 = ssub.s32 16384, 16384
      %25 = vsyncadd [#allocation6], %s24
      %s26 = sshll.u32 [#allocation5], 4
      %s27 = int_to_ptr.vmem [resolvable:$true] %s26
      %32 = dma.hbm_to_vmem [thread:$0]  %s1, 16384, %s27, [#allocation6], 128, 128, 8
    $region9: #{tpu_custom_call.1} parent=1 // pred_fallthru
      _
    // Predicated region
    $region10: #{tpu_custom_call.1} parent=1 // pred_check
      _
    $region11: #{tpu_custom_call.1} parent=1 // pred_check_branch
      %34 = sbr.rel (0) target = $region13
    $region12: #{tpu_custom_call.1} parent=1 // pred_region
      _
    $region13: #{tpu_custom_call.1} parent=1 // pred_fallthru
      _
    // Predicated region
    $region14: #{tpu_custom_call.1} parent=1 // pred_check
      _
    $region15: #{tpu_custom_call.1} parent=1 // pred_check_branch
      %36 = sbr.rel (0) target = $region17
    $region16: #{tpu_custom_call.1} parent=1 // pred_region
      %37 = dma.done [#allocation3], 1024
    $region17: #{tpu_custom_call.1} parent=1 // pred_fallthru
      _
    // Predicated region
    $region18: #{tpu_custom_call.1} parent=1 // pred_check
      _
    $region19: #{tpu_custom_call.1} parent=1 // pred_check_branch
      %39 = sbr.rel (0) target = $region21
    $region20: #{tpu_custom_call.1} parent=1 // pred_region
      %40 = dma.done [#allocation6], 16384
    $region21: #{tpu_custom_call.1} parent=1 // pred_fallthru
      _
    %p41 = scmp.eq.s32.totalorder 0, 0
    // Predicated region
    $region22: #{tpu_custom_call.1} parent=1 // pred_check
      %p42 = pneg %p41
    $region23: #{tpu_custom_call.1} parent=1 // pred_check_branch
      %44 = sbr.rel (%p42) target = $region25
    $region24: #{tpu_custom_call.1} parent=1 // pred_region
      %v45 = vld [vmem:[%s2] sm:$0x1]
      %v47 = vlaneseq
      %v48 = vshrl.u32 %v47, 7
      %v49 = vsub.s32 0, %v48
      %v50 = vrot.slane %v45, %v49
      %52 = vst [vmem:[#allocation7] sm:$0xff] %v50
    $region25: #{tpu_custom_call.1} parent=1 // pred_fallthru
      _
    %v53 = vld [vmem:[#allocation7] sm:$0xff]
    %v54 = vld [vmem:[#allocation2] sm:$0xff]
    %v55 = vld [vmem:[#allocation2 + $0x8] sm:$0xff]
    %v56 = vld [vmem:[#allocation2 + $0x10] sm:$0xff]
    %v57 = vld [vmem:[#allocation2 + $0x18] sm:$0xff]
    %v58 = vld [vmem:[#allocation2 + $0x20] sm:$0xff]
    %v59 = vld [vmem:[#allocation2 + $0x28] sm:$0xff]
    %v60 = vld [vmem:[#allocation2 + $0x30] sm:$0xff]
    %v61 = vld [vmem:[#allocation2 + $0x38] sm:$0xff]
    %v62 = vld [vmem:[#allocation5] sm:$0xff]
    %v63 = vld [vmem:[#allocation5 + $0x8] sm:$0xff]
    %v64 = vld [vmem:[#allocation5 + $0x10] sm:$0xff]
    %v65 = vld [vmem:[#allocation5 + $0x18] sm:$0xff]
    %v66 = vld [vmem:[#allocation5 + $0x20] sm:$0xff]
    %v67 = vld [vmem:[#allocation5 + $0x28] sm:$0xff]
    %v68 = vld [vmem:[#allocation5 + $0x30] sm:$0xff]
    %v69 = vld [vmem:[#allocation5 + $0x38] sm:$0xff]
    %v70 = vld [vmem:[#allocation5 + $0x40] sm:$0xff]
    %v71 = vld [vmem:[#allocation5 + $0x48] sm:$0xff]
    %v72 = vld [vmem:[#allocation5 + $0x50] sm:$0xff]
    %v73 = vld [vmem:[#allocation5 + $0x58] sm:$0xff]
    %v74 = vld [vmem:[#allocation5 + $0x60] sm:$0xff]
    %v75 = vld [vmem:[#allocation5 + $0x68] sm:$0xff]
    %v76 = vld [vmem:[#allocation5 + $0x70] sm:$0xff]
    %v77 = vld [vmem:[#allocation5 + $0x78] sm:$0xff]
    %v78 = vld [vmem:[#allocation5 + $0x80] sm:$0xff]
    %v79 = vld [vmem:[#allocation5 + $0x88] sm:$0xff]
    %v80 = vld [vmem:[#allocation5 + $0x90] sm:$0xff]
    %v81 = vld [vmem:[#allocation5 + $0x98] sm:$0xff]
    %v82 = vld [vmem:[#allocation5 + $0xa0] sm:$0xff]
    %v83 = vld [vmem:[#allocation5 + $0xa8] sm:$0xff]
    %v84 = vld [vmem:[#allocation5 + $0xb0] sm:$0xff]
    %v85 = vld [vmem:[#allocation5 + $0xb8] sm:$0xff]
    %v86 = vld [vmem:[#allocation5 + $0xc0] sm:$0xff]
    %v87 = vld [vmem:[#allocation5 + $0xc8] sm:$0xff]
    %v88 = vld [vmem:[#allocation5 + $0xd0] sm:$0xff]
    %v89 = vld [vmem:[#allocation5 + $0xd8] sm:$0xff]
    %v90 = vld [vmem:[#allocation5 + $0xe0] sm:$0xff]
    %v91 = vld [vmem:[#allocation5 + $0xe8] sm:$0xff]
    %v92 = vld [vmem:[#allocation5 + $0xf0] sm:$0xff]
    %v93 = vld [vmem:[#allocation5 + $0xf8] sm:$0xff]
    %v94 = vld [vmem:[#allocation5 + $0x100] sm:$0xff]
    %v95 = vld [vmem:[#allocation5 + $0x108] sm:$0xff]
    %v96 = vld [vmem:[#allocation5 + $0x110] sm:$0xff]
    %v97 = vld [vmem:[#allocation5 + $0x118] sm:$0xff]
    %v98 = vld [vmem:[#allocation5 + $0x120] sm:$0xff]
    %v99 = vld [vmem:[#allocation5 + $0x128] sm:$0xff]
    %v100 = vld [vmem:[#allocation5 + $0x130] sm:$0xff]
    %v101 = vld [vmem:[#allocation5 + $0x138] sm:$0xff]
    %v102 = vld [vmem:[#allocation5 + $0x140] sm:$0xff]
    %v103 = vld [vmem:[#allocation5 + $0x148] sm:$0xff]
    %v104 = vld [vmem:[#allocation5 + $0x150] sm:$0xff]
    %v105 = vld [vmem:[#allocation5 + $0x158] sm:$0xff]
    %v106 = vld [vmem:[#allocation5 + $0x160] sm:$0xff]
    %v107 = vld [vmem:[#allocation5 + $0x168] sm:$0xff]
    %v108 = vld [vmem:[#allocation5 + $0x170] sm:$0xff]
    %v109 = vld [vmem:[#allocation5 + $0x178] sm:$0xff]
    %v110 = vld [vmem:[#allocation5 + $0x180] sm:$0xff]
    %v111 = vld [vmem:[#allocation5 + $0x188] sm:$0xff]
    %v112 = vld [vmem:[#allocation5 + $0x190] sm:$0xff]
    %v113 = vld [vmem:[#allocation5 + $0x198] sm:$0xff]
    %v114 = vld [vmem:[#allocation5 + $0x1a0] sm:$0xff]
    %v115 = vld [vmem:[#allocation5 + $0x1a8] sm:$0xff]
    %v116 = vld [vmem:[#allocation5 + $0x1b0] sm:$0xff]
    %v117 = vld [vmem:[#allocation5 + $0x1b8] sm:$0xff]
    %v118 = vld [vmem:[#allocation5 + $0x1c0] sm:$0xff]
    %v119 = vld [vmem:[#allocation5 + $0x1c8] sm:$0xff]
    %v120 = vld [vmem:[#allocation5 + $0x1d0] sm:$0xff]
    %v121 = vld [vmem:[#allocation5 + $0x1d8] sm:$0xff]
    %v122 = vld [vmem:[#allocation5 + $0x1e0] sm:$0xff]
    %v123 = vld [vmem:[#allocation5 + $0x1e8] sm:$0xff]
    %v124 = vld [vmem:[#allocation5 + $0x1f0] sm:$0xff]
    %v125 = vld [vmem:[#allocation5 + $0x1f8] sm:$0xff]
    %v126 = vld [vmem:[#allocation5 + $0x200] sm:$0xff]
    %v127 = vld [vmem:[#allocation5 + $0x208] sm:$0xff]
    %v128 = vld [vmem:[#allocation5 + $0x210] sm:$0xff]
    %v129 = vld [vmem:[#allocation5 + $0x218] sm:$0xff]
    %v130 = vld [vmem:[#allocation5 + $0x220] sm:$0xff]
    %v131 = vld [vmem:[#allocation5 + $0x228] sm:$0xff]
    %v132 = vld [vmem:[#allocation5 + $0x230] sm:$0xff]
    %v133 = vld [vmem:[#allocation5 + $0x238] sm:$0xff]
    %v134 = vld [vmem:[#allocation5 + $0x240] sm:$0xff]
    %v135 = vld [vmem:[#allocation5 + $0x248] sm:$0xff]
    %v136 = vld [vmem:[#allocation5 + $0x250] sm:$0xff]
    %v137 = vld [vmem:[#allocation5 + $0x258] sm:$0xff]
    %v138 = vld [vmem:[#allocation5 + $0x260] sm:$0xff]
    %v139 = vld [vmem:[#allocation5 + $0x268] sm:$0xff]
    %v140 = vld [vmem:[#allocation5 + $0x270] sm:$0xff]
    %v141 = vld [vmem:[#allocation5 + $0x278] sm:$0xff]
    %v142 = vld [vmem:[#allocation5 + $0x280] sm:$0xff]
    %v143 = vld [vmem:[#allocation5 + $0x288] sm:$0xff]
    %v144 = vld [vmem:[#allocation5 + $0x290] sm:$0xff]
    %v145 = vld [vmem:[#allocation5 + $0x298] sm:$0xff]
    %v146 = vld [vmem:[#allocation5 + $0x2a0] sm:$0xff]
    %v147 = vld [vmem:[#allocation5 + $0x2a8] sm:$0xff]
    %v148 = vld [vmem:[#allocation5 + $0x2b0] sm:$0xff]
    %v149 = vld [vmem:[#allocation5 + $0x2b8] sm:$0xff]
    %v150 = vld [vmem:[#allocation5 + $0x2c0] sm:$0xff]
    %v151 = vld [vmem:[#allocation5 + $0x2c8] sm:$0xff]
    %v152 = vld [vmem:[#allocation5 + $0x2d0] sm:$0xff]
    %v153 = vld [vmem:[#allocation5 + $0x2d8] sm:$0xff]
    %v154 = vld [vmem:[#allocation5 + $0x2e0] sm:$0xff]
    %v155 = vld [vmem:[#allocation5 + $0x2e8] sm:$0xff]
    %v156 = vld [vmem:[#allocation5 + $0x2f0] sm:$0xff]
    %v157 = vld [vmem:[#allocation5 + $0x2f8] sm:$0xff]
    %v158 = vld [vmem:[#allocation5 + $0x300] sm:$0xff]
    %v159 = vld [vmem:[#allocation5 + $0x308] sm:$0xff]
    %v160 = vld [vmem:[#allocation5 + $0x310] sm:$0xff]
    %v161 = vld [vmem:[#allocation5 + $0x318] sm:$0xff]
    %v162 = vld [vmem:[#allocation5 + $0x320] sm:$0xff]
    %v163 = vld [vmem:[#allocation5 + $0x328] sm:$0xff]
    %v164 = vld [vmem:[#allocation5 + $0x330] sm:$0xff]
    %v165 = vld [vmem:[#allocation5 + $0x338] sm:$0xff]
    %v166 = vld [vmem:[#allocation5 + $0x340] sm:$0xff]
    %v167 = vld [vmem:[#allocation5 + $0x348] sm:$0xff]
    %v168 = vld [vmem:[#allocation5 + $0x350] sm:$0xff]
    %v169 = vld [vmem:[#allocation5 + $0x358] sm:$0xff]
    %v170 = vld [vmem:[#allocation5 + $0x360] sm:$0xff]
    %v171 = vld [vmem:[#allocation5 + $0x368] sm:$0xff]
    %v172 = vld [vmem:[#allocation5 + $0x370] sm:$0xff]
    %v173 = vld [vmem:[#allocation5 + $0x378] sm:$0xff]
    %v174 = vld [vmem:[#allocation5 + $0x380] sm:$0xff]
    %v175 = vld [vmem:[#allocation5 + $0x388] sm:$0xff]
    %v176 = vld [vmem:[#allocation5 + $0x390] sm:$0xff]
    %v177 = vld [vmem:[#allocation5 + $0x398] sm:$0xff]
    %v178 = vld [vmem:[#allocation5 + $0x3a0] sm:$0xff]
    %v179 = vld [vmem:[#allocation5 + $0x3a8] sm:$0xff]
    %v180 = vld [vmem:[#allocation5 + $0x3b0] sm:$0xff]
    %v181 = vld [vmem:[#allocation5 + $0x3b8] sm:$0xff]
    %v182 = vld [vmem:[#allocation5 + $0x3c0] sm:$0xff]
    %v183 = vld [vmem:[#allocation5 + $0x3c8] sm:$0xff]
    %v184 = vld [vmem:[#allocation5 + $0x3d0] sm:$0xff]
    %v185 = vld [vmem:[#allocation5 + $0x3d8] sm:$0xff]
    %v186 = vld [vmem:[#allocation5 + $0x3e0] sm:$0xff]
    %v187 = vld [vmem:[#allocation5 + $0x3e8] sm:$0xff]
    %v188 = vld [vmem:[#allocation5 + $0x3f0] sm:$0xff]
    %v189 = vld [vmem:[#allocation5 + $0x3f8] sm:$0xff]
    %190 = vmatprep.subr.mxu0 0.0
    %191 = vmatpush1.msra.mxu0 %v62
    %192 = vmatprep.subr.mxu0 0.0
    %193 = vmatpush1.msra.mxu0 %v63
    %194 = vmatprep.subr.mxu0 0.0
    %195 = vmatpush1.msra.mxu0 %v64
    %196 = vmatprep.subr.mxu0 0.0
    %197 = vmatpush1.msra.mxu0 %v65
    %198 = vmatprep.subr.mxu0 0.0
    %199 = vmatpush1.msra.mxu0 %v66
    %200 = vmatprep.subr.mxu0 0.0
    %201 = vmatpush1.msra.mxu0 %v67
    %202 = vmatprep.subr.mxu0 0.0
    %203 = vmatpush1.msra.mxu0 %v68
    %204 = vmatprep.subr.mxu0 0.0
    %205 = vmatpush1.msra.mxu0 %v69
    %206 = vmatprep.subr.mxu0 0.0
    %207 = vmatpush1.msra.mxu0 %v70
    %208 = vmatprep.subr.mxu0 0.0
    %209 = vmatpush1.msra.mxu0 %v71
    %210 = vmatprep.subr.mxu0 0.0
    %211 = vmatpush1.msra.mxu0 %v72
    %212 = vmatprep.subr.mxu0 0.0
    %213 = vmatpush1.msra.mxu0 %v73
    %214 = vmatprep.subr.mxu0 0.0
    %215 = vmatpush1.msra.mxu0 %v74
    %216 = vmatprep.subr.mxu0 0.0
    %217 = vmatpush1.msra.mxu0 %v75
    %218 = vmatprep.subr.mxu0 0.0
    %219 = vmatpush1.msra.mxu0 %v76
    %220 = vmatprep.subr.mxu0 0.0
    %221 = vmatpush1.msra.mxu0 %v77
    %222 = vmatprep.subr.mxu0 0.0
    %223 = vmatpush1.msra.mxu0 %v78
    %224 = vmatprep.subr.mxu0 0.0
    %225 = vmatpush1.msra.mxu0 %v79
    %226 = vmatprep.subr.mxu0 0.0
    %227 = vmatpush1.msra.mxu0 %v80
    %228 = vmatprep.subr.mxu0 0.0
    %229 = vmatpush1.msra.mxu0 %v81
    %230 = vmatprep.subr.mxu0 0.0
    %231 = vmatpush1.msra.mxu0 %v82
    %232 = vmatprep.subr.mxu0 0.0
    %233 = vmatpush1.msra.mxu0 %v83
    %234 = vmatprep.subr.mxu0 0.0
    %235 = vmatpush1.msra.mxu0 %v84
    %236 = vmatprep.subr.mxu0 0.0
    %237 = vmatpush1.msra.mxu0 %v85
    %238 = vmatprep.subr.mxu0 0.0
    %239 = vmatpush1.msra.mxu0 %v86
    %240 = vmatprep.subr.mxu0 0.0
    %241 = vmatpush1.msra.mxu0 %v87
    %242 = vmatprep.subr.mxu0 0.0
    %243 = vmatpush1.msra.mxu0 %v88
    %244 = vmatprep.subr.mxu0 0.0
    %245 = vmatpush1.msra.mxu0 %v89
    %246 = vmatprep.subr.mxu0 0.0
    %247 = vmatpush1.msra.mxu0 %v90
    %248 = vmatprep.subr.mxu0 0.0
    %249 = vmatpush1.msra.mxu0 %v91
    %250 = vmatprep.subr.mxu0 0.0
    %251 = vmatpush1.msra.mxu0 %v92
    %252 = vmatprep.subr.mxu0 0.0
    %253 = vmatpush1.msra.mxu0 %v93
    %254 = vmatprep.mubr.f32.mxu0 %v55
    %255 = vmatmul.mubr.f32.gmra.mrb[0].mxu0 %v54
    %v256 = vpop.f32.mrb[0].mxu0
    %v257 = vadd.f32 0.0, %v256
    %v258 = vpop.f32.mrb[0].mxu0
    %259 = vdwg.mxu0
    %260 = vmatprep.subr.mxu0 0.0
    %261 = vmatpush1.msra.mxu0 %v94
    %262 = vmatprep.subr.mxu0 0.0
    %263 = vmatpush1.msra.mxu0 %v95
    %264 = vmatprep.subr.mxu0 0.0
    %265 = vmatpush1.msra.mxu0 %v96
    %266 = vmatprep.subr.mxu0 0.0
    %267 = vmatpush1.msra.mxu0 %v97
    %268 = vmatprep.subr.mxu0 0.0
    %269 = vmatpush1.msra.mxu0 %v98
    %270 = vmatprep.subr.mxu0 0.0
    %271 = vmatpush1.msra.mxu0 %v99
    %272 = vmatprep.subr.mxu0 0.0
    %273 = vmatpush1.msra.mxu0 %v100
    %274 = vmatprep.subr.mxu0 0.0
    %275 = vmatpush1.msra.mxu0 %v101
    %276 = vmatprep.subr.mxu0 0.0
    %277 = vmatpush1.msra.mxu0 %v102
    %278 = vmatprep.subr.mxu0 0.0
    %279 = vmatpush1.msra.mxu0 %v103
    %280 = vmatprep.subr.mxu0 0.0
    %281 = vmatpush1.msra.mxu0 %v104
    %282 = vmatprep.subr.mxu0 0.0
    %283 = vmatpush1.msra.mxu0 %v105
    %284 = vmatprep.subr.mxu0 0.0
    %285 = vmatpush1.msra.mxu0 %v106
    %286 = vmatprep.subr.mxu0 0.0
    %287 = vmatpush1.msra.mxu0 %v107
    %288 = vmatprep.subr.mxu0 0.0
    %289 = vmatpush1.msra.mxu0 %v108
    %290 = vmatprep.subr.mxu0 0.0
    %291 = vmatpush1.msra.mxu0 %v109
    %292 = vmatprep.subr.mxu0 0.0
    %293 = vmatpush1.msra.mxu0 %v110
    %294 = vmatprep.subr.mxu0 0.0
    %295 = vmatpush1.msra.mxu0 %v111
    %296 = vmatprep.subr.mxu0 0.0
    %297 = vmatpush1.msra.mxu0 %v112
    %298 = vmatprep.subr.mxu0 0.0
    %299 = vmatpush1.msra.mxu0 %v113
    %300 = vmatprep.subr.mxu0 0.0
    %301 = vmatpush1.msra.mxu0 %v114
    %302 = vmatprep.subr.mxu0 0.0
    %303 = vmatpush1.msra.mxu0 %v115
    %304 = vmatprep.subr.mxu0 0.0
    %305 = vmatpush1.msra.mxu0 %v116
    %306 = vmatprep.subr.mxu0 0.0
    %307 = vmatpush1.msra.mxu0 %v117
    %308 = vmatprep.subr.mxu0 0.0
    %309 = vmatpush1.msra.mxu0 %v118
    %310 = vmatprep.subr.mxu0 0.0
    %311 = vmatpush1.msra.mxu0 %v119
    %312 = vmatprep.subr.mxu0 0.0
    %313 = vmatpush1.msra.mxu0 %v120
    %314 = vmatprep.subr.mxu0 0.0
    %315 = vmatpush1.msra.mxu0 %v121
    %316 = vmatprep.subr.mxu0 0.0
    %317 = vmatpush1.msra.mxu0 %v122
    %318 = vmatprep.subr.mxu0 0.0
    %319 = vmatpush1.msra.mxu0 %v123
    %320 = vmatprep.subr.mxu0 0.0
    %321 = vmatpush1.msra.mxu0 %v124
    %322 = vmatprep.subr.mxu0 0.0
    %323 = vmatpush1.msra.mxu0 %v125
    %324 = vmatprep.mubr.f32.mxu0 %v57
    %325 = vmatmul.mubr.f32.gmra.mrb[0].mxu0 %v56
    %v326 = vpop.f32.mrb[0].mxu0
    %v327 = vadd.f32 %v257, %v326
    %v328 = vpop.f32.mrb[0].mxu0
    %329 = vdwg.mxu0
    %330 = vmatprep.subr.mxu0 0.0
    %331 = vmatpush1.msra.mxu0 %v126
    %332 = vmatprep.subr.mxu0 0.0
    %333 = vmatpush1.msra.mxu0 %v127
    %334 = vmatprep.subr.mxu0 0.0
    %335 = vmatpush1.msra.mxu0 %v128
    %336 = vmatprep.subr.mxu0 0.0
    %337 = vmatpush1.msra.mxu0 %v129
    %338 = vmatprep.subr.mxu0 0.0
    %339 = vmatpush1.msra.mxu0 %v130
    %340 = vmatprep.subr.mxu0 0.0
    %341 = vmatpush1.msra.mxu0 %v131
    %342 = vmatprep.subr.mxu0 0.0
    %343 = vmatpush1.msra.mxu0 %v132
    %344 = vmatprep.subr.mxu0 0.0
    %345 = vmatpush1.msra.mxu0 %v133
    %346 = vmatprep.subr.mxu0 0.0
    %347 = vmatpush1.msra.mxu0 %v134
    %348 = vmatprep.subr.mxu0 0.0
    %349 = vmatpush1.msra.mxu0 %v135
    %350 = vmatprep.subr.mxu0 0.0
    %351 = vmatpush1.msra.mxu0 %v136
    %352 = vmatprep.subr.mxu0 0.0
    %353 = vmatpush1.msra.mxu0 %v137
    %354 = vmatprep.subr.mxu0 0.0
    %355 = vmatpush1.msra.mxu0 %v138
    %356 = vmatprep.subr.mxu0 0.0
    %357 = vmatpush1.msra.mxu0 %v139
    %358 = vmatprep.subr.mxu0 0.0
    %359 = vmatpush1.msra.mxu0 %v140
    %360 = vmatprep.subr.mxu0 0.0
    %361 = vmatpush1.msra.mxu0 %v141
    %362 = vmatprep.subr.mxu0 0.0
    %363 = vmatpush1.msra.mxu0 %v142
    %364 = vmatprep.subr.mxu0 0.0
    %365 = vmatpush1.msra.mxu0 %v143
    %366 = vmatprep.subr.mxu0 0.0
    %367 = vmatpush1.msra.mxu0 %v144
    %368 = vmatprep.subr.mxu0 0.0
    %369 = vmatpush1.msra.mxu0 %v145
    %370 = vmatprep.subr.mxu0 0.0
    %371 = vmatpush1.msra.mxu0 %v146
    %372 = vmatprep.subr.mxu0 0.0
    %373 = vmatpush1.msra.mxu0 %v147
    %374 = vmatprep.subr.mxu0 0.0
    %375 = vmatpush1.msra.mxu0 %v148
    %376 = vmatprep.subr.mxu0 0.0
    %377 = vmatpush1.msra.mxu0 %v149
    %378 = vmatprep.subr.mxu0 0.0
    %379 = vmatpush1.msra.mxu0 %v150
    %380 = vmatprep.subr.mxu0 0.0
    %381 = vmatpush1.msra.mxu0 %v151
    %382 = vmatprep.subr.mxu0 0.0
    %383 = vmatpush1.msra.mxu0 %v152
    %384 = vmatprep.subr.mxu0 0.0
    %385 = vmatpush1.msra.mxu0 %v153
    %386 = vmatprep.subr.mxu0 0.0
    %387 = vmatpush1.msra.mxu0 %v154
    %388 = vmatprep.subr.mxu0 0.0
    %389 = vmatpush1.msra.mxu0 %v155
    %390 = vmatprep.subr.mxu0 0.0
    %391 = vmatpush1.msra.mxu0 %v156
    %392 = vmatprep.subr.mxu0 0.0
    %393 = vmatpush1.msra.mxu0 %v157
    %394 = vmatprep.mubr.f32.mxu0 %v59
    %395 = vmatmul.mubr.f32.gmra.mrb[0].mxu0 %v58
    %v396 = vpop.f32.mrb[0].mxu0
    %v397 = vadd.f32 %v327, %v396
    %v398 = vpop.f32.mrb[0].mxu0
    %399 = vdwg.mxu0
    %400 = vmatprep.subr.mxu0 0.0
    %401 = vmatpush1.msra.mxu0 %v158
    %402 = vmatprep.subr.mxu0 0.0
    %403 = vmatpush1.msra.mxu0 %v159
    %404 = vmatprep.subr.mxu0 0.0
    %405 = vmatpush1.msra.mxu0 %v160
    %406 = vmatprep.subr.mxu0 0.0
    %407 = vmatpush1.msra.mxu0 %v161
    %408 = vmatprep.subr.mxu0 0.0
    %409 = vmatpush1.msra.mxu0 %v162
    %410 = vmatprep.subr.mxu0 0.0
    %411 = vmatpush1.msra.mxu0 %v163
    %412 = vmatprep.subr.mxu0 0.0
    %413 = vmatpush1.msra.mxu0 %v164
    %414 = vmatprep.subr.mxu0 0.0
    %415 = vmatpush1.msra.mxu0 %v165
    %416 = vmatprep.subr.mxu0 0.0
    %417 = vmatpush1.msra.mxu0 %v166
    %418 = vmatprep.subr.mxu0 0.0
    %419 = vmatpush1.msra.mxu0 %v167
    %420 = vmatprep.subr.mxu0 0.0
    %421 = vmatpush1.msra.mxu0 %v168
    %422 = vmatprep.subr.mxu0 0.0
    %423 = vmatpush1.msra.mxu0 %v169
    %424 = vmatprep.subr.mxu0 0.0
    %425 = vmatpush1.msra.mxu0 %v170
    %426 = vmatprep.subr.mxu0 0.0
    %427 = vmatpush1.msra.mxu0 %v171
    %428 = vmatprep.subr.mxu0 0.0
    %429 = vmatpush1.msra.mxu0 %v172
    %430 = vmatprep.subr.mxu0 0.0
    %431 = vmatpush1.msra.mxu0 %v173
    %432 = vmatprep.subr.mxu0 0.0
    %433 = vmatpush1.msra.mxu0 %v174
    %434 = vmatprep.subr.mxu0 0.0
    %435 = vmatpush1.msra.mxu0 %v175
    %436 = vmatprep.subr.mxu0 0.0
    %437 = vmatpush1.msra.mxu0 %v176
    %438 = vmatprep.subr.mxu0 0.0
    %439 = vmatpush1.msra.mxu0 %v177
    %440 = vmatprep.subr.mxu0 0.0
    %441 = vmatpush1.msra.mxu0 %v178
    %442 = vmatprep.subr.mxu0 0.0
    %443 = vmatpush1.msra.mxu0 %v179
    %444 = vmatprep.subr.mxu0 0.0
    %445 = vmatpush1.msra.mxu0 %v180
    %446 = vmatprep.subr.mxu0 0.0
    %447 = vmatpush1.msra.mxu0 %v181
    %448 = vmatprep.subr.mxu0 0.0
    %449 = vmatpush1.msra.mxu0 %v182
    %450 = vmatprep.subr.mxu0 0.0
    %451 = vmatpush1.msra.mxu0 %v183
    %452 = vmatprep.subr.mxu0 0.0
    %453 = vmatpush1.msra.mxu0 %v184
    %454 = vmatprep.subr.mxu0 0.0
    %455 = vmatpush1.msra.mxu0 %v185
    %456 = vmatprep.subr.mxu0 0.0
    %457 = vmatpush1.msra.mxu0 %v186
    %458 = vmatprep.subr.mxu0 0.0
    %459 = vmatpush1.msra.mxu0 %v187
    %460 = vmatprep.subr.mxu0 0.0
    %461 = vmatpush1.msra.mxu0 %v188
    %462 = vmatprep.subr.mxu0 0.0
    %463 = vmatpush1.msra.mxu0 %v189
    %464 = vmatprep.mubr.f32.mxu0 %v61
    %465 = vmatmul.mubr.f32.gmra.mrb[0].mxu0 %v60
    %v466 = vpop.f32.mrb[0].mxu0
    %v467 = vadd.f32 %v397, %v466
    %v468 = vpop.f32.mrb[0].mxu0
    %469 = vdwg.mxu0
    %v470 = vadd.f32 %v53, %v467
    %471 = vst [vmem:[#allocation7] sm:$0xff] %v470
    // Predicated region
    $region26: #{tpu_custom_call.1} parent=1 // pred_check
      _
    $region27: #{tpu_custom_call.1} parent=1 // pred_check_branch
      %473 = sbr.rel (0) target = $region29
    $region28: #{tpu_custom_call.1} parent=1 // pred_region
      %s475 = ssub.s32 128, 128
      %476 = vsyncadd [#allocation4], %s475
      %s478 = sshll.u32 [#allocation7], 4
      %s479 = int_to_ptr.vmem [resolvable:$true] %s478
      %481 = dma.vmem_to_hbm [thread:$0]  %s479, 128, %s3, [#allocation4]
    $region29: #{tpu_custom_call.1} parent=1 // pred_fallthru
      _
    // Predicated region
    $region30: #{tpu_custom_call.1} parent=1 // pred_check
      _
    $region31: #{tpu_custom_call.1} parent=1 // pred_check_branch
      %483 = sbr.rel (0) target = $region33
    $region32: #{tpu_custom_call.1} parent=1 // pred_region
      %484 = dma.done [#allocation4], 128
    $region33: #{tpu_custom_call.1} parent=1 // pred_fallthru
      _
    %485 = vsyncpa [#allocation3], 1
    %486 = vsyncpa [#allocation6], 1
    %487 = vsyncpa [#allocation4], 1

</llo_original>
